<compile_context>
chip_gen: v7x
topology: tpu7x:2x2x1
jax: 0.10.0
libtpu: 0.0.40
codegen_flags: <defaults>
</compile_context>

<pallas_src>
import functools

import numpy as np
import jax
import jax.numpy as jnp
from jax.experimental import pallas as pl
from jax.experimental.pallas import tpu as pltpu

# Undefined globals in the PyTorch snippet -> deterministic constants.
INV_SCALE_FACTOR = 8.0
DROPOUT_P = 0.1


def _attn_kernel(x1_ref, x2_ref, v_ref, bits_ref, o_ref, *, inv_scale, dropout_p):
    # v1 / inv_scale_factor  (MXU matmul, f32 accumulation; scale folded to one mul)
    s = jnp.dot(x1_ref[...], x2_ref[...], preferred_element_type=jnp.float32)
    s = s * (1.0 / inv_scale)

    # softmax(dim=-1), numerically stable
    m = jnp.max(s, axis=-1, keepdims=True)
    e = jnp.exp(s - m)
    denom = jnp.sum(e, axis=-1, keepdims=True)
    inv = pl.reciprocal(denom, approx=True)          # EUP vrcp, ~free next to VPU work

    if dropout_p > 0.0:
        # Integer-threshold dropout: P(bits < thresh) = p  ->  drop with prob p.
        # Keep-scale 1/(1-p) folded into the (M,1) reciprocal instead of an (M,N) mul.
        threshold = np.uint32(min(int(dropout_p * (1 << 32)), (1 << 32) - 1))
        keep = bits_ref[...] >= threshold
        inv = inv * (1.0 / (1.0 - dropout_p))
        p = jnp.where(keep, e * inv, 0.0)
    else:
        p = e * inv

    # TODO(synk): for large M/K/N/D, cast matmul operands to bf16 (f32 accumulate)
    # and pad N/D to multiples of 128; irrelevant at these latency-bound shapes.
    o_ref[...] = jnp.dot(p, v_ref[...], preferred_element_type=jnp.float32)


def scaled_attention(x1, x2, value, *, key=None,
                     inv_scale=INV_SCALE_FACTOR, dropout_p=DROPOUT_P):
    """x1: (B,M,K), x2: (B,K,N), value: (B,N,D)  ->  (B,M,D) float32."""
    if x1.dtype != jnp.float32:
        x1 = x1.astype(jnp.float32)
    if x2.dtype != jnp.float32:
        x2 = x2.astype(jnp.float32)
    if value.dtype != jnp.float32:
        value = value.astype(jnp.float32)

    B, M, K = x1.shape
    B2, K2, N = x2.shape
    B3, N2, D = value.shape
    assert B == B2 == B3 and K == K2 and N == N2

    # Dropout bits drawn outside the kernel (independent per batch element), so no
    # in-kernel PRNG state is needed and every grid step gets a distinct mask.
    if dropout_p > 0.0:
        if key is None:
            key = jax.random.PRNGKey(0)
        bits = jax.random.bits(key, (B, M, N), dtype=jnp.uint32)
    else:
        bits = jnp.zeros((B, M, N), dtype=jnp.uint32)

    kernel = functools.partial(_attn_kernel, inv_scale=float(inv_scale),
                               dropout_p=float(dropout_p))
    return pl.pallas_call(
        kernel,
        out_shape=jax.ShapeDtypeStruct((B, M, D), jnp.float32),
        grid=(B,),
        in_specs=[
            pl.BlockSpec((None, M, K), lambda b: (b, 0, 0)),   # x1
            pl.BlockSpec((None, K, N), lambda b: (b, 0, 0)),   # x2
            pl.BlockSpec((None, N, D), lambda b: (b, 0, 0)),   # value
            pl.BlockSpec((None, M, N), lambda b: (b, 0, 0)),   # dropout bits
        ],
        out_specs=pl.BlockSpec((None, M, D), lambda b: (b, 0, 0)),
        compiler_params=pltpu.CompilerParams(
            dimension_semantics=("parallel",)),
    )(x1, x2, value, bits)


if __name__ == "__main__":
    key = jax.random.PRNGKey(0)
    k1, k2, k3, k4, kd = jax.random.split(key, 5)

    # Shapes implied by the module: x1 (1,16,20), x2 (1,20,40); value (1,40,32).
    x1 = jax.random.normal(k1, (1, 16, 20), dtype=jnp.float32)
    x2 = jax.random.normal(k2, (1, 20, 40), dtype=jnp.float32)
    value = jax.random.normal(k3, (1, 40, 32), dtype=jnp.float32)

    # Deterministic correctness check (dropout disabled).
    out_nodrop = scaled_attention(x1, x2, value, dropout_p=0.0)
    jax.block_until_ready(out_nodrop)
    s = jnp.matmul(x1, x2) / INV_SCALE_FACTOR
    ref = jnp.matmul(jax.nn.softmax(s, axis=-1), value)
    assert jnp.allclose(out_nodrop, ref, atol=5e-3, rtol=5e-3), "mismatch vs reference"
    assert out_nodrop.shape == (1, 16, 32)

    # Batched run (parallel grid axis) with the module's dropout semantics.
    B = 4
    xb1 = jax.random.normal(k4, (B, 16, 20), dtype=jnp.float32)
    xb2 = jax.random.normal(jax.random.fold_in(k4, 1), (B, 20, 40), dtype=jnp.float32)
    vb = jax.random.normal(jax.random.fold_in(k4, 2), (B, 40, 32), dtype=jnp.float32)
    out = scaled_attention(xb1, xb2, vb, key=kd, dropout_p=DROPOUT_P)
    jax.block_until_ready(out)
    assert out.shape == (B, 16, 32)
    assert bool(jnp.all(jnp.isfinite(out)))

    print("KERNEL_OK")
</pallas_src>

<mosaic_0001>
module attributes {stable_mosaic.version = 11 : i64} {
  func.func @_attn_kernel(%arg0: i32, %arg1: memref<1x16x20xf32, #tpu.memory_space<vmem>>, %arg2: memref<1x20x40xf32, #tpu.memory_space<vmem>>, %arg3: memref<1x40x32xf32, #tpu.memory_space<vmem>>, %arg4: memref<1x16x40xi32, #tpu.memory_space<vmem>>, %arg5: memref<1x16x32xf32, #tpu.memory_space<vmem>>) attributes {dimension_semantics = [#tpu.dimension_semantics<parallel>], iteration_bounds = array<i64: 1>, scalar_prefetch = 0 : i64, scratch_operands = 0 : i64, tpu.core_type = #tpu.core_type<tc>, window_params = [{transform_indices = @transform_0, window_bounds = array<i64: 1, 16, 20>}, {transform_indices = @transform_1, window_bounds = array<i64: 1, 20, 40>}, {transform_indices = @transform_2, window_bounds = array<i64: 1, 40, 32>}, {transform_indices = @transform_3, window_bounds = array<i64: 1, 16, 40>}, {transform_indices = @transform_4, window_bounds = array<i64: 1, 16, 32>}]} {
    %c0 = arith.constant 0 : index
    %c0_0 = arith.constant 0 : index
    %c0_1 = arith.constant 0 : index
    %0 = vector.load %arg1[%c0, %c0_0, %c0_1] : memref<1x16x20xf32, #tpu.memory_space<vmem>>, vector<1x16x20xf32>
    %1 = vector.shape_cast %0 : vector<1x16x20xf32> to vector<16x20xf32>
    %c0_2 = arith.constant 0 : index
    %c0_3 = arith.constant 0 : index
    %c0_4 = arith.constant 0 : index
    %2 = vector.load %arg2[%c0_2, %c0_3, %c0_4] : memref<1x20x40xf32, #tpu.memory_space<vmem>>, vector<1x20x40xf32>
    %3 = vector.shape_cast %2 : vector<1x20x40xf32> to vector<20x40xf32>
    %cst = arith.constant dense<0.000000e+00> : vector<16x40xf32>
    %4 = tpu.matmul %1, %3, %cst {dimension_numbers = #tpu.dot_dimension_numbers<[1], [0], [0], [1], [0, 0, 1, 1], [], []>} : vector<16x20xf32>, vector<20x40xf32>, vector<16x40xf32> -> vector<16x40xf32>
    %cst_5 = arith.constant 1.250000e-01 : f32
    %5 = vector.broadcast %cst_5 : f32 to vector<16x40xf32>
    %6 = arith.mulf %4, %5 : vector<16x40xf32>
    %cst_6 = arith.constant dense<0xFF800000> : vector<16xf32>
    %7 = vector.multi_reduction <maximumf>, %6, %cst_6 [1] : vector<16x40xf32> to vector<16xf32>
    %8 = vector.shape_cast %7 : vector<16xf32> to vector<16x1xf32>
    %9 = vector.broadcast %8 : vector<16x1xf32> to vector<16x40xf32>
    %10 = arith.subf %6, %9 : vector<16x40xf32>
    %11 = math.exp %10 : vector<16x40xf32>
    %cst_7 = arith.constant dense<0.000000e+00> : vector<16xf32>
    %12 = vector.multi_reduction <add>, %11, %cst_7 [1] : vector<16x40xf32> to vector<16xf32>
    %13 = vector.shape_cast %12 : vector<16xf32> to vector<16x1xf32>
    %14 = tpu.reciprocal %13 {approx = true} : vector<16x1xf32> -> vector<16x1xf32>
    %15 = vector.broadcast %14 : vector<16x1xf32> to vector<16x40xf32>
    %16 = arith.mulf %11, %15 : vector<16x40xf32>
    %c0_8 = arith.constant 0 : index
    %c0_9 = arith.constant 0 : index
    %c0_10 = arith.constant 0 : index
    %17 = vector.load %arg3[%c0_8, %c0_9, %c0_10] : memref<1x40x32xf32, #tpu.memory_space<vmem>>, vector<1x40x32xf32>
    %18 = vector.shape_cast %17 : vector<1x40x32xf32> to vector<40x32xf32>
    %cst_11 = arith.constant dense<0.000000e+00> : vector<16x32xf32>
    %19 = tpu.matmul %16, %18, %cst_11 {dimension_numbers = #tpu.dot_dimension_numbers<[1], [0], [0], [1], [0, 0, 1, 1], [], []>} : vector<16x40xf32>, vector<40x32xf32>, vector<16x32xf32> -> vector<16x32xf32>
    %c0_12 = arith.constant 0 : index
    %c0_13 = arith.constant 0 : index
    %c0_14 = arith.constant 0 : index
    %20 = vector.load %arg5[%c0_12, %c0_13, %c0_14] : memref<1x16x32xf32, #tpu.memory_space<vmem>>, vector<1x16x32xf32>
    %21 = vector.shape_cast %20 : vector<1x16x32xf32> to vector<16x32xf32>
    %22 = vector.shape_cast %19 : vector<16x32xf32> to vector<1x16x32xf32>
    tpu.vector_store %arg5[%c0_12, %c0_13, %c0_14], %22 {strides = array<i32>} : memref<1x16x32xf32, #tpu.memory_space<vmem>>, vector<1x16x32xf32>,
    return
  }
  func.func @transform_0(%arg0: i32) -> (i32, i32, i32) {
    %c0_i32 = arith.constant 0 : i32
    %c0_i32_0 = arith.constant 0 : i32
    %c0_i32_1 = arith.constant 0 : i32
    return %arg0, %c0_i32, %c0_i32_0 : i32, i32, i32
  }
  func.func @transform_1(%arg0: i32) -> (i32, i32, i32) {
    %c0_i32 = arith.constant 0 : i32
    %c0_i32_0 = arith.constant 0 : i32
    %c0_i32_1 = arith.constant 0 : i32
    return %arg0, %c0_i32, %c0_i32_0 : i32, i32, i32
  }
  func.func @transform_2(%arg0: i32) -> (i32, i32, i32) {
    %c0_i32 = arith.constant 0 : i32
    %c0_i32_0 = arith.constant 0 : i32
    %c0_i32_1 = arith.constant 0 : i32
    return %arg0, %c0_i32, %c0_i32_0 : i32, i32, i32
  }
  func.func @transform_3(%arg0: i32) -> (i32, i32, i32) {
    %c0_i32 = arith.constant 0 : i32
    %c0_i32_0 = arith.constant 0 : i32
    %c0_i32_1 = arith.constant 0 : i32
    return %arg0, %c0_i32, %c0_i32_0 : i32, i32, i32
  }
  func.func @transform_4(%arg0: i32) -> (i32, i32, i32) {
    %c0_i32 = arith.constant 0 : i32
    %c0_i32_0 = arith.constant 0 : i32
    %c0_i32_1 = arith.constant 0 : i32
    return %arg0, %c0_i32, %c0_i32_0 : i32, i32, i32
  }
}

</mosaic_0001>

<llo_original>
// kernel: tpu_custom_call.1
$region0: #{tpu_custom_call.1}
  #allocation0 [shape = 'u32[]', space=smem, size = 0x4, offset = 0x4, fixed_abs, tag = 'smem constant byte address 0x4 - core index']
  #allocation1 [shape = 'u32[144,128]{1,0:T(1,128)}', space=vmem, size = 0x12000, scoped, tag = 'internal scratch']
  %s0 = inlined_call_operand.vmem [shape: f32[1,16,20], index: 0, kind: input, shape index: {}]
  %s1 = inlined_call_operand.vmem [shape: f32[1,20,40], index: 1, kind: input, shape index: {}]
  %s2 = inlined_call_operand.vmem [shape: f32[1,40,32], index: 2, kind: input, shape index: {}]
  %s3 = inlined_call_operand.vmem [shape: u32[1,16,40], index: 3, kind: input, shape index: {}]
  %s4 = inlined_call_operand.hbm [shape: f32[1,16,32], index: 4, kind: output, shape index: {}]
  %s5 = sld [smem:[#allocation0]]
  $region26: #{tpu_custom_call.1} parent=0
    _
  %s7 = ssub.s32 1, %s5
  %s8 = scalar_select 0, %s7, %s5
  $region1: #{tpu_custom_call.1} parent=0
    #allocation2 [shape = 'u8[8192]{0}', space=vmem, size = 0x2000, scoped, tag = 'output window, operand 0, single buffered']
    #allocation3 [shape = 's32[1]{0}', space=sflag, size = 0x4, scoped, tag = 'scoped memory for tpu_custom_call.1']
    %9 = vsyncpa [#allocation3], 0
    // Predicated region
    $region2: #{tpu_custom_call.1} parent=1 // pred_check
      _
    $region3: #{tpu_custom_call.1} parent=1 // pred_check_branch
      %11 = sbr.rel (0) target = $region5
    $region4: #{tpu_custom_call.1} parent=1 // pred_region
      _
    $region5: #{tpu_custom_call.1} parent=1 // pred_fallthru
      _
    // Predicated region
    $region6: #{tpu_custom_call.1} parent=1 // pred_check
      _
    $region7: #{tpu_custom_call.1} parent=1 // pred_check_branch
      %13 = sbr.rel (0) target = $region9
    $region8: #{tpu_custom_call.1} parent=1 // pred_region
      _
    $region9: #{tpu_custom_call.1} parent=1 // pred_fallthru
      _
    // Predicated region
    $region10: #{tpu_custom_call.1} parent=1 // pred_check
      _
    $region11: #{tpu_custom_call.1} parent=1 // pred_check_branch
      %15 = sbr.rel (0) target = $region13
    $region12: #{tpu_custom_call.1} parent=1 // pred_region
      _
    $region13: #{tpu_custom_call.1} parent=1 // pred_fallthru
      _
    // Predicated region
    $region14: #{tpu_custom_call.1} parent=1 // pred_check
      _
    $region15: #{tpu_custom_call.1} parent=1 // pred_check_branch
      %17 = sbr.rel (0) target = $region17
    $region16: #{tpu_custom_call.1} parent=1 // pred_region
      _
    $region17: #{tpu_custom_call.1} parent=1 // pred_fallthru
      _
    %v18 = vld [vmem:[%s0] sm:$0xff]
    %v19 = vld [vmem:[%s0 + $0x8] sm:$0xff]
    %v20 = vld [vmem:[%s1] sm:$0xff]
    %v21 = vld [vmem:[%s1 + $0x8] sm:$0xff]
    %v22 = vld [vmem:[%s1 + $0x10] sm:$0xf]
    %vm23 = vcmask 162816
    %v25 = vsel %vm23, %v18, 0
    %v28 = vsel %vm23, %v19, 0
    %vm30 = vcmask 1043456
    %v32 = vsel %vm30, %v22, 0
    %34 = vmatprep.subr.mxu0 0.0
    %35 = vmatpush1.msra.mxu0 %v20
    %36 = vmatprep.subr.mxu0 0.0
    %37 = vmatpush1.msra.mxu0 %v21
    %38 = vmatprep.subr.mxu0 0.0
    %39 = vmatpush1.msra.mxu0 %v32
    %40 = vmatprep.subr.mxu0 0.0
    %41 = vmatpush1.msra.mxu0 0.0
    %42 = vmatprep.subr.mxu0 0.0
    %43 = vmatpush1.msra.mxu0 0.0
    %44 = vmatprep.subr.mxu0 0.0
    %45 = vmatpush1.msra.mxu0 0.0
    %46 = vmatprep.subr.mxu0 0.0
    %47 = vmatpush1.msra.mxu0 0.0
    %48 = vmatprep.subr.mxu0 0.0
    %49 = vmatpush1.msra.mxu0 0.0
    %50 = vmatprep.subr.mxu0 0.0
    %51 = vmatpush1.msra.mxu0 0.0
    %52 = vmatprep.subr.mxu0 0.0
    %53 = vmatpush1.msra.mxu0 0.0
    %54 = vmatprep.subr.mxu0 0.0
    %55 = vmatpush1.msra.mxu0 0.0
    %56 = vmatprep.subr.mxu0 0.0
    %57 = vmatpush1.msra.mxu0 0.0
    %58 = vmatprep.subr.mxu0 0.0
    %59 = vmatpush1.msra.mxu0 0.0
    %60 = vmatprep.subr.mxu0 0.0
    %61 = vmatpush1.msra.mxu0 0.0
    %62 = vmatprep.subr.mxu0 0.0
    %63 = vmatpush1.msra.mxu0 0.0
    %64 = vmatprep.subr.mxu0 0.0
    %65 = vmatpush1.msra.mxu0 0.0
    %66 = vmatprep.subr.mxu0 0.0
    %67 = vmatpush1.msra.mxu0 0.0
    %68 = vmatprep.subr.mxu0 0.0
    %69 = vmatpush1.msra.mxu0 0.0
    %70 = vmatprep.subr.mxu0 0.0
    %71 = vmatpush1.msra.mxu0 0.0
    %72 = vmatprep.subr.mxu0 0.0
    %73 = vmatpush1.msra.mxu0 0.0
    %74 = vmatprep.subr.mxu0 0.0
    %75 = vmatpush1.msra.mxu0 0.0
    %76 = vmatprep.subr.mxu0 0.0
    %77 = vmatpush1.msra.mxu0 0.0
    %78 = vmatprep.subr.mxu0 0.0
    %79 = vmatpush1.msra.mxu0 0.0
    %80 = vmatprep.subr.mxu0 0.0
    %81 = vmatpush1.msra.mxu0 0.0
    %82 = vmatprep.subr.mxu0 0.0
    %83 = vmatpush1.msra.mxu0 0.0
    %84 = vmatprep.subr.mxu0 0.0
    %85 = vmatpush1.msra.mxu0 0.0
    %86 = vmatprep.subr.mxu0 0.0
    %87 = vmatpush1.msra.mxu0 0.0
    %88 = vmatprep.subr.mxu0 0.0
    %89 = vmatpush1.msra.mxu0 0.0
    %90 = vmatprep.subr.mxu0 0.0
    %91 = vmatpush1.msra.mxu0 0.0
    %92 = vmatprep.subr.mxu0 0.0
    %93 = vmatpush1.msra.mxu0 0.0
    %94 = vmatprep.subr.mxu0 0.0
    %95 = vmatpush1.msra.mxu0 0.0
    %96 = vmatprep.subr.mxu0 0.0
    %97 = vmatpush1.msra.mxu0 0.0
    %98 = vmatprep.mubr.f32.mxu0 0.0
    %99 = vmatmul.mubr.f32.gmra.mrb[0].mxu0 %v25
    %v100 = vpop.f32.mrb[0].mxu0
    %v101 = vadd.f32 0.0, %v100
    %v102 = vpop.f32.mrb[0].mxu0
    %103 = vmatprep.mubr.f32.mxu0 0.0
    %104 = vmatmul.mubr.f32.gmra.mrb[0].mxu0 %v28
    %v105 = vpop.f32.mrb[0].mxu0
    %v106 = vadd.f32 0.0, %v105
    %v107 = vpop.f32.mrb[0].mxu0
    %108 = vdwg.mxu0
    %v109 = vmul.f32 %v101, 0.125
    %v110 = vmul.f32 %v106, 0.125
    %vm111 = vcmask 326656
    %v112 = vsel %vm111, %v109, -inf
    %113 = vmax.xlane.f32.xlu0 %v112
    %v114 = vpop.xlane.xlu0 %113
    %v115 = vsel %vm111, %v110, -inf
    %116 = vmax.xlane.f32.xlu0 %v115
    %v117 = vpop.xlane.xlu0 %116
    %v118 = vsub.f32 %v109, %v114
    %v119 = vsub.f32 %v110, %v117
    %v120 = vmul.f32 %v118, 1.442695
    %v121 = vpow.pop %v120
    %v122 = vmul.f32 %v119, 1.442695
    %v123 = vpow.pop %v122
    %v124 = vsel %vm111, %v121, 0.0
    %125 = vadd.xlane.f32.xlu0 %v124
    %v126 = vpop.xlane.xlu0 %125
    %v127 = vsel %vm111, %v123, 0.0
    %128 = vadd.xlane.f32.xlu0 %v127
    %v129 = vpop.xlane.xlu0 %128
    %v130 = vrcp.pop %v126
    %v131 = vrcp.pop %v129
    %v132 = vmul.f32 %v121, %v130
    %v133 = vmul.f32 %v123, %v131
    %v134 = vld [vmem:[%s2] sm:$0xff]
    %v135 = vld [vmem:[%s2 + $0x8] sm:$0xff]
    %v136 = vld [vmem:[%s2 + $0x10] sm:$0xff]
    %v137 = vld [vmem:[%s2 + $0x18] sm:$0xff]
    %v138 = vld [vmem:[%s2 + $0x20] sm:$0xff]
    %v140 = vsel %vm111, %v132, 0
    %v143 = vsel %vm111, %v133, 0
    %145 = vmatprep.subr.mxu0 0.0
    %146 = vmatpush1.msra.mxu0 %v134
    %147 = vmatprep.subr.mxu0 0.0
    %148 = vmatpush1.msra.mxu0 %v135
    %149 = vmatprep.subr.mxu0 0.0
    %150 = vmatpush1.msra.mxu0 %v136
    %151 = vmatprep.subr.mxu0 0.0
    %152 = vmatpush1.msra.mxu0 %v137
    %153 = vmatprep.subr.mxu0 0.0
    %154 = vmatpush1.msra.mxu0 %v138
    %155 = vmatprep.subr.mxu0 0.0
    %156 = vmatpush1.msra.mxu0 0.0
    %157 = vmatprep.subr.mxu0 0.0
    %158 = vmatpush1.msra.mxu0 0.0
    %159 = vmatprep.subr.mxu0 0.0
    %160 = vmatpush1.msra.mxu0 0.0
    %161 = vmatprep.subr.mxu0 0.0
    %162 = vmatpush1.msra.mxu0 0.0
    %163 = vmatprep.subr.mxu0 0.0
    %164 = vmatpush1.msra.mxu0 0.0
    %165 = vmatprep.subr.mxu0 0.0
    %166 = vmatpush1.msra.mxu0 0.0
    %167 = vmatprep.subr.mxu0 0.0
    %168 = vmatpush1.msra.mxu0 0.0
    %169 = vmatprep.subr.mxu0 0.0
    %170 = vmatpush1.msra.mxu0 0.0
    %171 = vmatprep.subr.mxu0 0.0
    %172 = vmatpush1.msra.mxu0 0.0
    %173 = vmatprep.subr.mxu0 0.0
    %174 = vmatpush1.msra.mxu0 0.0
    %175 = vmatprep.subr.mxu0 0.0
    %176 = vmatpush1.msra.mxu0 0.0
    %177 = vmatprep.subr.mxu0 0.0
    %178 = vmatpush1.msra.mxu0 0.0
    %179 = vmatprep.subr.mxu0 0.0
    %180 = vmatpush1.msra.mxu0 0.0
    %181 = vmatprep.subr.mxu0 0.0
    %182 = vmatpush1.msra.mxu0 0.0
    %183 = vmatprep.subr.mxu0 0.0
    %184 = vmatpush1.msra.mxu0 0.0
    %185 = vmatprep.subr.mxu0 0.0
    %186 = vmatpush1.msra.mxu0 0.0
    %187 = vmatprep.subr.mxu0 0.0
    %188 = vmatpush1.msra.mxu0 0.0
    %189 = vmatprep.subr.mxu0 0.0
    %190 = vmatpush1.msra.mxu0 0.0
    %191 = vmatprep.subr.mxu0 0.0
    %192 = vmatpush1.msra.mxu0 0.0
    %193 = vmatprep.subr.mxu0 0.0
    %194 = vmatpush1.msra.mxu0 0.0
    %195 = vmatprep.subr.mxu0 0.0
    %196 = vmatpush1.msra.mxu0 0.0
    %197 = vmatprep.subr.mxu0 0.0
    %198 = vmatpush1.msra.mxu0 0.0
    %199 = vmatprep.subr.mxu0 0.0
    %200 = vmatpush1.msra.mxu0 0.0
    %201 = vmatprep.subr.mxu0 0.0
    %202 = vmatpush1.msra.mxu0 0.0
    %203 = vmatprep.subr.mxu0 0.0
    %204 = vmatpush1.msra.mxu0 0.0
    %205 = vmatprep.subr.mxu0 0.0
    %206 = vmatpush1.msra.mxu0 0.0
    %207 = vmatprep.subr.mxu0 0.0
    %208 = vmatpush1.msra.mxu0 0.0
    %209 = vmatprep.mubr.f32.mxu0 0.0
    %210 = vmatmul.mubr.f32.gmra.mrb[0].mxu0 %v140
    %v211 = vpop.f32.mrb[0].mxu0
    %v212 = vadd.f32 0.0, %v211
    %v213 = vpop.f32.mrb[0].mxu0
    %214 = vmatprep.mubr.f32.mxu0 0.0
    %215 = vmatmul.mubr.f32.gmra.mrb[0].mxu0 %v143
    %v216 = vpop.f32.mrb[0].mxu0
    %v217 = vadd.f32 0.0, %v216
    %v218 = vpop.f32.mrb[0].mxu0
    %219 = vdwg.mxu0
    %vm220 = vcmask 261120
    %221 = vst.msk [vmem:[#allocation2] sm:$0xff] %vm220, %v212
    %222 = vst.msk [vmem:[#allocation2 + $0x8] sm:$0xff] %vm220, %v217
    // Predicated region
    $region18: #{tpu_custom_call.1} parent=1 // pred_check
      _
    $region19: #{tpu_custom_call.1} parent=1 // pred_check_branch
      %224 = sbr.rel (0) target = $region21
    $region20: #{tpu_custom_call.1} parent=1 // pred_region
      %s226 = ssub.s32 256, 256
      %227 = vsyncadd [#allocation3], %s226
      %s228 = sshll.u32 [#allocation2], 4
      %s229 = int_to_ptr.vmem [resolvable:$true] %s228
      %234 = dma.vmem_to_hbm [thread:$0]  %s229, 256, %s4, [#allocation3], 128, 128, 8
    $region21: #{tpu_custom_call.1} parent=1 // pred_fallthru
      _
    // Predicated region
    $region22: #{tpu_custom_call.1} parent=1 // pred_check
      _
    $region23: #{tpu_custom_call.1} parent=1 // pred_check_branch
      %236 = sbr.rel (0) target = $region25
    $region24: #{tpu_custom_call.1} parent=1 // pred_region
      %237 = dma.done [#allocation3], 256
    $region25: #{tpu_custom_call.1} parent=1 // pred_fallthru
      _
    %238 = vsyncpa [#allocation3], 1

</llo_original>
